<compile_context>
chip_gen: v7x
topology: tpu7x:2x2x1
jax: 0.10.0
libtpu: 0.0.40
codegen_flags: <defaults>
</compile_context>

<pallas_src>
import jax
import jax.numpy as jnp
from jax.experimental import pallas as pl
from jax.experimental.pallas import tpu as pltpu


def _round_up(x: int, k: int) -> int:
    return -(-x // k) * k


def _bilinear_matrix(out_size: int, in_size: int) -> jnp.ndarray:
    """Row-stochastic (out_size, in_size) matrix implementing PyTorch
    nn.Upsample(mode='bilinear', align_corners=False) along one axis."""
    scale = in_size / out_size
    dst = jnp.arange(out_size, dtype=jnp.float32)
    src = scale * (dst + 0.5) - 0.5
    src = jnp.maximum(src, 0.0)                      # PyTorch clamps negative coords
    x0 = jnp.floor(src)
    lam = src - x0
    x0i = x0.astype(jnp.int32)
    x1i = jnp.minimum(x0i + 1, in_size - 1)
    rows = jnp.arange(out_size)
    m = jnp.zeros((out_size, in_size), dtype=jnp.float32)
    m = m.at[rows, x0i].add(1.0 - lam)
    m = m.at[rows, x1i].add(lam)
    return m


def _bcast_mul_kernel(sid_ref, w_ref, x_ref, o_ref):
    # sid_ref: (n_row_tiles,) int32 scale-id per row tile (SMEM; used only by index_maps)
    # w_ref:   (1, 1, Lt) float32 resized-attention row for this tile's scale
    #          (VMEM-resident across the inner row axis; re-DMAed only at scale changes)
    # x_ref:   (Rt, Lt) skip tile          o_ref: (Rt, Lt)
    del sid_ref
    o_ref[...] = (x_ref[...] * w_ref[0]).astype(o_ref.dtype)


def _choose_tiles(per_scale_rows, l_pad, itemsize, target_bytes=4 << 20):
    """Pick (Rt, Lt).  Lt is a multiple of 128 (lane-dense, unmasked vst); Rt is a
    multiple of the dtype's native sublane pack.  The ~4 MiB/tile target keeps the
    double-buffered in+out footprint (~16 MiB) inside the 32 MiB scoped-VMEM limit
    on every generation, including v7x's 64 MiB physical VMEM."""
    min_sub = max(8, 32 // itemsize)                  # 8 f32, 16 bf16, 32 int8/fp8
    # Lane-dense column tile: full width if min_sub rows of it fit the budget.
    max_lt = max(128, (target_bytes // (min_sub * itemsize)) // 128 * 128)
    lt = min(l_pad, max_lt)
    # Row tile: fill the budget ...
    rt = max(min_sub, (target_bytes // (lt * itemsize)) // min_sub * min_sub)
    # ... never taller than the tallest scale (bounds zero-row padding) ...
    rt = min(rt, max(_round_up(r, min_sub) for r in per_scale_rows))
    # ... and keep >= 2 row tiles so v7x's second TensorCore has work.
    total = sum(_round_up(r, min_sub) for r in per_scale_rows)
    if total >= 2 * min_sub:
        rt = min(rt, max(min_sub, (total // 2) // min_sub * min_sub))
    return rt, lt


def _u_attention_dense_impl(weights, skips, dims, features):
    """One fused pallas_call covering all given scales."""
    H, W = weights.shape[-2], weights.shape[-1]
    w2d = weights.reshape(H, W).astype(jnp.float32)
    n = skips[0].shape[0]
    dtype = skips[0].dtype
    itemsize = jnp.dtype(dtype).itemsize
    num_scales = len(skips)

    # ---- bilinear resize: tiny static-shape matmuls, done once per scale in JAX ----
    p_list, m_list, rflat = [], [], []
    for d, c, sk in zip(dims, features, skips):
        assert sk.shape == (n, c, d, d), (sk.shape, (n, c, d, d))
        assert sk.dtype == dtype
        a_mat = _bilinear_matrix(d, H)                # (d, H)
        bt_mat = _bilinear_matrix(d, W).T             # (W, d)
        rflat.append((a_mat @ w2d @ bt_mat).reshape(-1))   # (d*d,) float32
        p_list.append(d * d)
        m_list.append(n * c)

    # ---- lane-dense layout planning (pure python ints) ----
    min_l = []
    for p, m in zip(p_list, m_list):
        f = next((f for f in range(1, m + 1) if m % f == 0 and (p * f) % 128 == 0), None)
        min_l.append(p * f if f is not None else _round_up(p, 128))
    l_pad = max(min_l)                                 # common lane width, % 128 == 0
    folds = [max(f for f in range(1, m + 1) if m % f == 0 and p * f <= l_pad)
             for p, m in zip(p_list, m_list)]
    rows = [m // f for m, f in zip(m_list, folds)]

    rt, lt = _choose_tiles(rows, l_pad, itemsize)

    # ---- build fused operands: stacked skips, per-scale weight rows, scale ids ----
    x_parts, w_rows, sid_parts, meta = [], [], [], []
    row0 = 0
    for i, (sk, p, f, r) in enumerate(zip(skips, p_list, folds, rows)):
        L = p * f
        r_pad = _round_up(r, rt)
        x2d = sk.reshape(r, L)                         # free row-major regrouping
        if r_pad != r or L != l_pad:
            x2d = jnp.pad(x2d, ((0, r_pad - r), (0, l_pad - L)))
        x_parts.append(x2d)
        w_row = jnp.tile(rflat[i], f)                  # stays float32
        if L != l_pad:
            w_row = jnp.pad(w_row, (0, l_pad - L))
        w_rows.append(w_row)
        sid_parts.append(jnp.full((r_pad // rt,), i, dtype=jnp.int32))
        meta.append((row0, r, L, sk.shape))
        row0 += r_pad

    x_all = x_parts[0] if num_scales == 1 else jnp.concatenate(x_parts, axis=0)
    w_all = jnp.stack(w_rows)[:, None, :]              # (S, 1, l_pad) float32
    sid = sid_parts[0] if num_scales == 1 else jnp.concatenate(sid_parts)

    r_total = x_all.shape[0]
    n_row = r_total // rt                               # rows were padded: exact
    n_col = pl.cdiv(l_pad, lt)

    if n_col == 1:
        grid = (n_row,)
        w_spec = pl.BlockSpec((1, 1, lt), lambda r, s: (s[r], 0, 0))
        xo_spec = pl.BlockSpec((rt, lt), lambda r, s: (r, 0))
        sem = ("parallel",)
    else:
        # Rows innermost: the weight-row block index changes only when the scale
        # changes, so it is not re-DMAed every step.
        grid = (n_col, n_row)
        w_spec = pl.BlockSpec((1, 1, lt), lambda c, r, s: (s[r], 0, c))
        xo_spec = pl.BlockSpec((rt, lt), lambda c, r, s: (r, c))
        sem = ("parallel", "parallel")

    out = pl.pallas_call(
        _bcast_mul_kernel,
        out_shape=jax.ShapeDtypeStruct((r_total, l_pad), dtype),
        grid_spec=pltpu.PrefetchScalarGridSpec(
            num_scalar_prefetch=1,
            grid=grid,
            in_specs=[w_spec, xo_spec],
            out_specs=xo_spec,
        ),
        compiler_params=pltpu.CompilerParams(
            dimension_semantics=sem,
            vmem_limit_bytes=32 << 20,
        ),
    )(sid, w_all, x_all)

    # Slice each scale back out of the stacked result (pads are dropped).
    return [out[r0:r0 + r, :L].reshape(shape) for r0, r, L, shape in meta]


# Below this total size, one fused call wins (dispatch-bound regime); above it the
# fused path's stack/pad copies cost more HBM traffic than the saved dispatches.
_FUSE_TOTAL_BYTES = 4 << 20


def u_attention_dense(weights, skips, dims, features):
    """weights: (1, 1, H, W); skips[i]: (N, features[i], dims[i], dims[i])."""
    if not skips:
        return []
    total_bytes = sum(int(s.size) * jnp.dtype(s.dtype).itemsize for s in skips)
    if len(skips) == 1 or total_bytes <= _FUSE_TOTAL_BYTES:
        return _u_attention_dense_impl(weights, skips, dims, features)
    # Large inputs: one call per scale avoids the fused path's stacking copies
    # (reshape is a free view); per-call dispatch is negligible vs HBM traffic here.
    return [_u_attention_dense_impl(weights, [sk], [d], [c])[0]
            for sk, d, c in zip(skips, dims, features)]


if __name__ == "__main__":
    key = jax.random.PRNGKey(0)
    k_w, k_s0, k_s1 = jax.random.split(key, 3)

    # Module config (small): two scales.
    dims = [16, 8]
    features = [4, 8]
    batch = 2

    weights = jax.random.uniform(k_w, (1, 1, 16, 16), dtype=jnp.float32)
    skips = [
        jax.random.normal(k_s0, (batch, features[0], dims[0], dims[0]), dtype=jnp.float32),
        jax.random.normal(k_s1, (batch, features[1], dims[1], dims[1]), dtype=jnp.float32),
    ]

    outs = u_attention_dense(weights, skips, dims, features)
    for o in outs:
        jax.block_until_ready(o)

    # Sanity: shapes match and result equals plain-JAX bilinear resize + broadcast mul.
    H, W = weights.shape[-2], weights.shape[-1]
    w2d = weights.reshape(H, W)
    for d, sk, o in zip(dims, skips, outs):
        assert o.shape == sk.shape
        a = _bilinear_matrix(d, H)
        bt = _bilinear_matrix(d, W).T
        ref = sk * (a @ w2d @ bt)[None, None, :, :]
        assert jnp.allclose(o, ref, atol=1e-5, rtol=1e-5), \
            float(jnp.max(jnp.abs(o - ref)))

    print("KERNEL_OK")
</pallas_src>

<mosaic_0001>
module attributes {stable_mosaic.version = 11 : i64} {
  func.func @_bcast_mul_kernel(%arg0: i32, %arg1: memref<2xi32, #tpu.memory_space<smem>>, %arg2: memref<1x1x256xf32, #tpu.memory_space<vmem>>, %arg3: memref<8x256xf32, #tpu.memory_space<vmem>>, %arg4: memref<8x256xf32, #tpu.memory_space<vmem>>) attributes {dimension_semantics = [#tpu.dimension_semantics<parallel>], iteration_bounds = array<i64: 2>, scalar_prefetch = 1 : i64, scratch_operands = 0 : i64, tpu.core_type = #tpu.core_type<tc>, window_params = [{transform_indices = @transform_0, window_bounds = array<i64: 1, 1, 256>}, {transform_indices = @transform_1, window_bounds = array<i64: 8, 256>}, {transform_indices = @transform_2, window_bounds = array<i64: 8, 256>}]} {
    %c0 = arith.constant 0 : index
    %c0_0 = arith.constant 0 : index
    %0 = vector.load %arg3[%c0, %c0_0] : memref<8x256xf32, #tpu.memory_space<vmem>>, vector<8x256xf32>
    %c0_1 = arith.constant 0 : index
    %c0_2 = arith.constant 0 : index
    %c0_3 = arith.constant 0 : index
    %1 = vector.load %arg2[%c0_1, %c0_2, %c0_3] : memref<1x1x256xf32, #tpu.memory_space<vmem>>, vector<1x1x256xf32>
    %2 = vector.shape_cast %1 : vector<1x1x256xf32> to vector<1x256xf32>
    %3 = vector.broadcast %2 : vector<1x256xf32> to vector<8x256xf32>
    %4 = arith.mulf %0, %3 : vector<8x256xf32>
    %c0_4 = arith.constant 0 : index
    %c0_5 = arith.constant 0 : index
    %5 = vector.load %arg4[%c0_4, %c0_5] : memref<8x256xf32, #tpu.memory_space<vmem>>, vector<8x256xf32>
    tpu.vector_store %arg4[%c0_4, %c0_5], %4 {strides = array<i32>} : memref<8x256xf32, #tpu.memory_space<vmem>>, vector<8x256xf32>,
    return
  }
  func.func @transform_0(%arg0: i32, %arg1: memref<2xi32, #tpu.memory_space<smem>>) -> (i32, i32, i32) {
    %0 = arith.index_cast %arg0 : i32 to index
    %1 = memref.load %arg1[%0] : memref<2xi32, #tpu.memory_space<smem>>
    %c0_i32 = arith.constant 0 : i32
    %c0_i32_0 = arith.constant 0 : i32
    %c0_i32_1 = arith.constant 0 : i32
    return %1, %c0_i32, %c0_i32_0 : i32, i32, i32
  }
  func.func @transform_1(%arg0: i32, %arg1: memref<2xi32, #tpu.memory_space<smem>>) -> (i32, i32) {
    %c0_i32 = arith.constant 0 : i32
    %c0_i32_0 = arith.constant 0 : i32
    return %arg0, %c0_i32 : i32, i32
  }
  func.func @transform_2(%arg0: i32, %arg1: memref<2xi32, #tpu.memory_space<smem>>) -> (i32, i32) {
    %c0_i32 = arith.constant 0 : i32
    %c0_i32_0 = arith.constant 0 : i32
    return %arg0, %c0_i32 : i32, i32
  }
}

</mosaic_0001>

<llo_original>
// kernel: tpu_custom_call.1
$region0: #{tpu_custom_call.1}
  #allocation0 [shape = 'u32[]', space=smem, size = 0x4, offset = 0x4, fixed_abs, tag = 'smem constant byte address 0x4 - core index']
  #allocation1 [shape = 'u32[144,128]{1,0:T(1,128)}', space=vmem, size = 0x12000, scoped, tag = 'internal scratch']
  #allocation2 [shape = 's32[1]{0}', space=sflag, size = 0x4, scoped, tag = 'scoped memory for tpu_custom_call.1']
  #allocation3 [shape = 'u8[512]{0}', space=smem, size = 0x200, scoped, tag = 'prefetched SMEM operand 0']
  %s0 = inlined_call_operand.hbm [shape: s32[2], index: 0, kind: input, shape index: {}]
  %s1 = inlined_call_operand.hbm [shape: f32[2,1,256], index: 1, kind: input, shape index: {}]
  %s2 = inlined_call_operand.hbm [shape: f32[16,256], index: 2, kind: input, shape index: {}]
  %s3 = inlined_call_operand.hbm [shape: f32[16,256], index: 3, kind: output, shape index: {}]
  %s4 = sld [smem:[#allocation0]]
  $region49: #{tpu_custom_call.1} parent=0
    _
  %s6 = ssub.s32 1, %s4
  %s7 = scalar_select 0, %s6, %s4
  %9 = dma.hbm_to_smem %s0, 16, [#allocation3], [#allocation2]
  %10 = dma.done [#allocation2], 16
  %11 = sfence
  $region1: #{tpu_custom_call.1} parent=0
    #allocation4 [shape = 'u8[2048]{0}', space=vmem, size = 0x800, scoped, tag = 'input window, operand 1']
    #allocation5 [shape = 's32[2]{0}', space=sflag, size = 0x8, scoped, tag = 'scoped memory for tpu_custom_call.1']
    #allocation6 [shape = 's32[2]{0}', space=sflag, size = 0x8, scoped, tag = 'scoped memory for tpu_custom_call.1']
    #allocation7 [shape = 'u8[16384]{0}', space=vmem, size = 0x4000, scoped, tag = 'input window, operand 2']
    #allocation8 [shape = 's32[2]{0}', space=sflag, size = 0x8, scoped, tag = 'scoped memory for tpu_custom_call.1']
    #allocation9 [shape = 'u8[16384]{0}', space=vmem, size = 0x4000, scoped, tag = 'output window, operand 0']
    %12 = vsyncpa [#allocation5], 0
    %s13 = scalar_lea.sflag [#allocation5], 1
    %14 = vsyncpa %s13, 0
    %15 = vsyncpa [#allocation8], 0
    %s16 = scalar_lea.sflag [#allocation8], 1
    %17 = vsyncpa %s16, 0
    %18 = vsyncpa [#allocation6], 0
    %s19 = scalar_lea.sflag [#allocation6], 1
    %20 = vsyncpa %s19, 0
    loop: start=0, step=1, limit=4
    $region2: #{tpu_custom_call.1} parent=1 // loop_pre_header
      _
    $region3: #{tpu_custom_call.1} parent=1 // loop_header
      %s22 = sphi 0, %s26
      %p23 = scmp.ge.s32.totalorder %s22, 4
      %s34 = sphi 0, %s36
      %s37 = sphi 0, %s34
      %s38 = sphi 0, %s37
      %s54 = sphi 0, %s38
      %s60 = sphi 0, %s62
      %s63 = sphi 0, %s60
      %s64 = sphi 0, %s63
      %s80 = sphi 0, %s64
      %s86 = sphi 0, %s88
      %s89 = sphi 0, %s86
      %s90 = sphi 0, %s89
      %s106 = sphi 0, %s90
    $region4: #{tpu_custom_call.1} parent=1 // loop_header_branch
      %25 = sbr.rel (%p23) target = $region8
    $region5: #{tpu_custom_call.1} parent=1 // loop_body
      %s27 = ssub.s32 %s22, 1
      %s28 = ssub.s32 %s22, 2
      %s29 = sadd.s32 %s22, 1
      %s30 = sld [smem:[#allocation3 + %s22]]
      %s31 = sld [smem:[#allocation3 + %s29]]
      %s32 = ssub.s32 %s30, %s31
      %p33 = scmp.eq.s32.totalorder %s32, 0
      %s35 = sadd.s32 %s34, 1
      %s36 = scalar_select %p33, %s34, %s35
      %p39 = pneg %p33
      %p40 = scmp.eq.s32.totalorder %s22, 1
      %p41 = por %p39, %p40
      %p42 = scmp.ne.s32.totalorder %s34, %s37
      %p43 = scmp.eq.s32.totalorder %s22, 0
      %p44 = por %p42, %p43
      %p45 = scmp.ne.s32.totalorder %s34, %s37
      %p46 = scmp.eq.s32.totalorder %s27, 1
      %p47 = por %p45, %p46
      %p48 = scmp.ne.s32.totalorder %s37, %s38
      %p49 = scmp.eq.s32.totalorder %s27, 0
      %p50 = por %p48, %p49
      %p51 = scmp.ne.s32.totalorder %s37, %s38
      %p52 = scmp.eq.s32.totalorder %s28, 1
      %p53 = por %p51, %p52
      %p55 = scmp.ne.s32.totalorder %s38, %s54
      %p56 = scmp.eq.s32.totalorder %s28, 0
      %p57 = por %p55, %p56
      %s58 = ssub.s32 %s22, %s29
      %p59 = scmp.eq.s32.totalorder %s58, 0
      %s61 = sadd.s32 %s60, 1
      %s62 = scalar_select %p59, %s60, %s61
      %p65 = pneg %p59
      %p66 = scmp.eq.s32.totalorder %s22, 1
      %p67 = por %p65, %p66
      %p68 = scmp.ne.s32.totalorder %s60, %s63
      %p69 = scmp.eq.s32.totalorder %s22, 0
      %p70 = por %p68, %p69
      %p71 = scmp.ne.s32.totalorder %s60, %s63
      %p72 = scmp.eq.s32.totalorder %s27, 1
      %p73 = por %p71, %p72
      %p74 = scmp.ne.s32.totalorder %s63, %s64
      %p75 = scmp.eq.s32.totalorder %s27, 0
      %p76 = por %p74, %p75
      %p77 = scmp.ne.s32.totalorder %s63, %s64
      %p78 = scmp.eq.s32.totalorder %s28, 1
      %p79 = por %p77, %p78
      %p81 = scmp.ne.s32.totalorder %s64, %s80
      %p82 = scmp.eq.s32.totalorder %s28, 0
      %p83 = por %p81, %p82
      %s84 = ssub.s32 %s22, %s29
      %p85 = scmp.eq.s32.totalorder %s84, 0
      %s87 = sadd.s32 %s86, 1
      %s88 = scalar_select %p85, %s86, %s87
      %p91 = pneg %p85
      %p92 = scmp.eq.s32.totalorder %s22, 1
      %p93 = por %p91, %p92
      %p94 = scmp.ne.s32.totalorder %s86, %s89
      %p95 = scmp.eq.s32.totalorder %s22, 0
      %p96 = por %p94, %p95
      %p97 = scmp.ne.s32.totalorder %s86, %s89
      %p98 = scmp.eq.s32.totalorder %s27, 1
      %p99 = por %p97, %p98
      %p100 = scmp.ne.s32.totalorder %s89, %s90
      %p101 = scmp.eq.s32.totalorder %s27, 0
      %p102 = por %p100, %p101
      %p103 = scmp.ne.s32.totalorder %s89, %s90
      %p104 = scmp.eq.s32.totalorder %s28, 1
      %p105 = por %p103, %p104
      %p107 = scmp.ne.s32.totalorder %s90, %s106
      %p108 = scmp.eq.s32.totalorder %s28, 0
      %p109 = por %p107, %p108
      %p110 = scmp.le.s32.totalorder 1, %s22
      %p111 = scmp.lt.s32.totalorder %s22, 3
      %p112 = pnand %p110, %p111
      %p113 = pneg %p112
      // Predicated region
      $region9: #{tpu_custom_call.1} parent=5 // pred_check
        _
      $region10: #{tpu_custom_call.1} parent=5 // pred_check_branch
        %115 = sbr.rel (%p112) target = $region12
      $region11: #{tpu_custom_call.1} parent=5 // pred_region
        %s116 = ssub.s32 %s22, 1
      $region12: #{tpu_custom_call.1} parent=5 // pred_fallthru
        _
      %p117 = scmp.lt.s32.totalorder %s22, 2
      // Predicated region
      $region13: #{tpu_custom_call.1} parent=5 // pred_check
        %p118 = pneg %p117
      $region14: #{tpu_custom_call.1} parent=5 // pred_check_branch
        %120 = sbr.rel (%p118) target = $region16
      $region15: #{tpu_custom_call.1} parent=5 // pred_region
        // Predicated region
        $region17: #{tpu_custom_call.1} parent=15 // pred_check
          %p121 = pneg %p44
        $region18: #{tpu_custom_call.1} parent=15 // pred_check_branch
          %123 = sbr.rel (%p121) target = $region20
        $region19: #{tpu_custom_call.1} parent=15 // pred_region
          %s124 = sand.u32 %s34, 1
          %s125 = scalar_lea.sflag [#allocation5], %s124
          %s126 = sand.u32 %s34, 1
          %s127 = smul.addr %s126, 2
          %s128 = scalar_lea.vmem [#allocation4], %s127
          %s129 = sld [smem:[#allocation3 + %s22]]
          %s131 = ssub.s32 32, 32
          %132 = vsyncadd %s125, %s131
          %s133 = smul.addr %s129, 2
          %s134 = smul.addr %s133, 16
          %s135 = scalar_lea.hbm %s1, %s134
          %s137 = sshll.u32 %s128, 4
          %s138 = int_to_ptr.vmem [resolvable:$true] %s137
          %140 = dma.hbm_to_vmem [thread:$0]  %s135, 32, %s138, %s125
        $region20: #{tpu_custom_call.1} parent=15 // pred_fallthru
          _
        // Predicated region
        $region21: #{tpu_custom_call.1} parent=15 // pred_check
          %p141 = pneg %p70
        $region22: #{tpu_custom_call.1} parent=15 // pred_check_branch
          %143 = sbr.rel (%p141) target = $region24
        $region23: #{tpu_custom_call.1} parent=15 // pred_region
          %s144 = sand.u32 %s60, 1
          %s145 = scalar_lea.sflag [#allocation8], %s144
          %s146 = sand.u32 %s60, 1
          %s147 = smul.addr %s146, 16
          %s148 = scalar_lea.vmem [#allocation7], %s147
          %s150 = ssub.s32 256, 256
          %151 = vsyncadd %s145, %s150
          %s152 = smul.addr %s22, 2
          %s153 = smul.addr %s152, 128
          %s154 = scalar_lea.hbm %s2, %s153
          %s156 = sshll.u32 %s148, 4
          %s157 = int_to_ptr.vmem [resolvable:$true] %s156
          %159 = dma.hbm_to_vmem [thread:$0]  %s154, 256, %s157, %s145
        $region24: #{tpu_custom_call.1} parent=15 // pred_fallthru
          _
      $region16: #{tpu_custom_call.1} parent=5 // pred_fallthru
        _
      %p160 = scmp.le.s32.totalorder 1, %s22
      %p161 = scmp.lt.s32.totalorder %s22, 3
      %p162 = pnand %p160, %p161
      %p163 = pneg %p162
      // Predicated region
      $region25: #{tpu_custom_call.1} parent=5 // pred_check
        _
      $region26: #{tpu_custom_call.1} parent=5 // pred_check_branch
        %165 = sbr.rel (%p162) target = $region28
      $region27: #{tpu_custom_call.1} parent=5 // pred_region
        %s166 = ssub.s32 %s22, 1
        %s167 = sand.u32 %s37, 1
        %s168 = scalar_lea.sflag [#allocation5], %s167
        %s169 = sand.u32 %s37, 1
        %s170 = smul.addr %s169, 2
        %s171 = scalar_lea.vmem [#allocation4], %s170
        // Predicated region
        $region29: #{tpu_custom_call.1} parent=27 // pred_check
          %p172 = pneg %p50
        $region30: #{tpu_custom_call.1} parent=27 // pred_check_branch
          %174 = sbr.rel (%p172) target = $region32
        $region31: #{tpu_custom_call.1} parent=27 // pred_region
          %175 = dma.done %s168, 32
        $region32: #{tpu_custom_call.1} parent=27 // pred_fallthru
          _
        %s176 = sand.u32 %s63, 1
        %s177 = scalar_lea.sflag [#allocation8], %s176
        %s178 = sand.u32 %s63, 1
        %s179 = smul.addr %s178, 16
        %s180 = scalar_lea.vmem [#allocation7], %s179
        // Predicated region
        $region33: #{tpu_custom_call.1} parent=27 // pred_check
          %p181 = pneg %p76
        $region34: #{tpu_custom_call.1} parent=27 // pred_check_branch
          %183 = sbr.rel (%p181) target = $region36
        $region35: #{tpu_custom_call.1} parent=27 // pred_region
          %184 = dma.done %s177, 256
        $region36: #{tpu_custom_call.1} parent=27 // pred_fallthru
          _
        %s185 = sand.u32 %s37, 1
        %s186 = scalar_lea.sflag [#allocation5], %s185
        %s187 = sand.u32 %s37, 1
        %s188 = smul.addr %s187, 2
        %s189 = scalar_lea.vmem [#allocation4], %s188
        %p190 = pneg %p50
        %p191 = pneg %p47
        %s192 = sand.u32 %s63, 1
        %s193 = scalar_lea.sflag [#allocation8], %s192
        %s194 = sand.u32 %s63, 1
        %s195 = smul.addr %s194, 16
        %s196 = scalar_lea.vmem [#allocation7], %s195
        %p197 = pneg %p76
        %p198 = pneg %p73
        %p199 = pneg %p102
        %p200 = pneg %p99
        %s201 = sand.u32 %s89, 1
        %s202 = scalar_lea.sflag [#allocation6], %s201
        %s203 = sand.u32 %s89, 1
        %s204 = smul.addr %s203, 16
        %s205 = scalar_lea.vmem [#allocation9], %s204
        %s206 = sld [smem:[#allocation3 + %s27]]
        %v207 = vld [vmem:[%s180] sm:$0xff]
        %v208 = vld [vmem:[%s180 + $0x8] sm:$0xff]
        %v209 = vld [vmem:[%s171] sm:$0x3]
        %v211 = vlaneseq
        %v212 = vshrl.u32 %v211, 7
        %v213 = vsub.s32 0, %v212
        %v214 = vrot.slane %v209, %v213
        %v215 = vlaneseq
        %v216 = vshrl.u32 %v215, 7
        %v217 = vsub.s32 1, %v216
        %v218 = vrot.slane %v209, %v217
        %v221 = vmul.f32 %v207, %v214
        %v222 = vmul.f32 %v208, %v218
        %223 = vst [vmem:[%s205] sm:$0xff] %v221
        %224 = vst [vmem:[%s205 + $0x8] sm:$0xff] %v222
        %s225 = sand.u32 %s89, 1
        %s226 = scalar_lea.sflag [#allocation6], %s225
        %s227 = sand.u32 %s89, 1
        %s228 = smul.addr %s227, 16
        %s229 = scalar_lea.vmem [#allocation9], %s228
        // Predicated region
        $region37: #{tpu_custom_call.1} parent=27 // pred_check
          %p230 = pneg %p99
        $region38: #{tpu_custom_call.1} parent=27 // pred_check_branch
          %232 = sbr.rel (%p230) target = $region40
        $region39: #{tpu_custom_call.1} parent=27 // pred_region
          %s234 = ssub.s32 256, 256
          %235 = vsyncadd %s226, %s234
          %s236 = smul.addr %s27, 2
          %s237 = smul.addr %s236, 128
          %s238 = scalar_lea.hbm %s3, %s237
          %s240 = sshll.u32 %s229, 4
          %s241 = int_to_ptr.vmem [resolvable:$true] %s240
          %243 = dma.vmem_to_hbm [thread:$0]  %s241, 256, %s238, %s226
        $region40: #{tpu_custom_call.1} parent=27 // pred_fallthru
          _
      $region28: #{tpu_custom_call.1} parent=5 // pred_fallthru
        _
      %p244 = scmp.le.s32.totalorder 2, %s22
      // Predicated region
      $region41: #{tpu_custom_call.1} parent=5 // pred_check
        %p245 = pneg %p244
      $region42: #{tpu_custom_call.1} parent=5 // pred_check_branch
        %247 = sbr.rel (%p245) target = $region44
      $region43: #{tpu_custom_call.1} parent=5 // pred_region
        %s248 = ssub.s32 %s22, 2
        // Predicated region
        $region45: #{tpu_custom_call.1} parent=43 // pred_check
          %p249 = pneg %p105
        $region46: #{tpu_custom_call.1} parent=43 // pred_check_branch
          %251 = sbr.rel (%p249) target = $region48
        $region47: #{tpu_custom_call.1} parent=43 // pred_region
          %s252 = sand.u32 %s90, 1
          %s253 = scalar_lea.sflag [#allocation6], %s252
          %s254 = sand.u32 %s90, 1
          %s255 = smul.addr %s254, 16
          %s256 = scalar_lea.vmem [#allocation9], %s255
          %257 = dma.done %s253, 256
        $region48: #{tpu_custom_call.1} parent=43 // pred_fallthru
          _
      $region44: #{tpu_custom_call.1} parent=5 // pred_fallthru
        _
    $region6: #{tpu_custom_call.1} parent=1 // loop_footer
      %s26 = sadd.s32 1, %s22
    $region7: #{tpu_custom_call.1} parent=1 // loop_footer_branch
      %21 = sbr.rel target = $region3
    $region8: #{tpu_custom_call.1} parent=1 // loop_exit
      _
    %258 = vsyncpa [#allocation5], 1
    %s259 = scalar_lea.sflag [#allocation5], 1
    %260 = vsyncpa %s259, 1
    %261 = vsyncpa [#allocation8], 1
    %s262 = scalar_lea.sflag [#allocation8], 1
    %263 = vsyncpa %s262, 1
    %264 = vsyncpa [#allocation6], 1
    %s265 = scalar_lea.sflag [#allocation6], 1
    %266 = vsyncpa %s265, 1

</llo_original>
